<compile_context>
chip_gen: v6e
topology: v6e:2x2x1
jax: 0.10.0
libtpu: 0.0.40
codegen_flags: <defaults>
</compile_context>

<pallas_src>
import functools

import jax
import jax.numpy as jnp
from jax.experimental import pallas as pl
from jax.experimental.pallas import tpu as pltpu


def _round_up(x, m):
    return ((x + m - 1) // m) * m


def _pick_tiles(n):
    """Decoupled row tile (t_m) and reduction tile (t_k); n padded to t_m."""
    if n >= 2048:
        t_m = 512
    elif n >= 512:
        t_m = 256
    else:
        t_m = 128
    n_p = _round_up(n, t_m)
    row_blocks = n_p // t_m
    # reduction tile: largest multiple of t_m that divides n_p, targeting ~2048 rows
    # (bigger DMAs, fewer grid steps; A tile double-buffered bf16 <= 4 MiB).
    target_kb = max(1, 2048 // t_m)
    kb = 1
    for d in range(1, min(target_kb, row_blocks) + 1):
        if row_blocks % d == 0:
            kb = d
    t_k = t_m * kb
    return t_m, t_k, n_p


# ----------------------------- Pallas kernels -------------------------------


def _linear_kernel(x_ref, w_ref, h_ref):
    # H = X @ W   (bf16 inputs, f32 MXU accumulation, bf16 result for the big matmul)
    h_ref[...] = jnp.dot(
        x_ref[...], w_ref[...], preferred_element_type=jnp.float32
    ).astype(h_ref.dtype)


def _gcn_agg_kernel(t_k, a_ref, h_ref, b_ref, alpha_ref, o_ref):
    # grid = (row tiles of Ahat [parallel], reduction tiles over N [arbitrary])
    # h_ref is the full (n_p, cout_p) VMEM-resident activation; slice the k-slab here.
    k = pl.program_id(1)
    start = pl.multiple_of(k * t_k, t_k)
    part = jnp.dot(
        a_ref[...], h_ref[pl.ds(start, t_k), :], preferred_element_type=jnp.float32
    )

    @pl.when(k == 0)
    def _():
        o_ref[...] = part

    @pl.when(k > 0)
    def _():
        o_ref[...] += part

    @pl.when(k == pl.num_programs(1) - 1)
    def _():
        y = o_ref[...] + b_ref[...]                                     # GCNConv bias
        y = jnp.maximum(y, 0.0) + alpha_ref[...] * jnp.minimum(y, 0.0)  # PReLU (per-chan)
        # F.normalize(p=2, dim=1, eps=1e-12): rsqrt path keeps the VPU slot free
        # (transcendental goes to the EUP) and replaces the divide with a multiply.
        sumsq = jnp.sum(y * y, axis=-1, keepdims=True)
        inv = jax.lax.rsqrt(jnp.maximum(sumsq, 1e-24))  # == 1/max(||y||, 1e-12)
        o_ref[...] = y * inv


# ----------------------------- wrappers --------------------------------------


def gcn_encoder(x, a_hat, w, b, prelu_alpha, *, adjacency_dtype=jnp.bfloat16):
    """hidden = normalize(prelu(Ahat @ (X @ W) + b)) via two Pallas kernels.

    adjacency_dtype=bf16 halves the dominant N^2 HBM stream (~0.4% per-entry error,
    accumulation stays f32); pass jnp.float32 if downstream tasks are sensitive.
    """
    n, cin = x.shape
    cout = w.shape[1]

    cin_p = _round_up(cin, 128)     # lane width
    cout_p = _round_up(cout, 128)
    t_m, t_k, n_p = _pick_tiles(n)

    f32, bf16 = jnp.float32, jnp.bfloat16
    a_bytes = jnp.dtype(adjacency_dtype).itemsize

    # Cast first, then zero-pad (jnp.pad): no padded f32 N^2 temp ever hits HBM.
    x_p = jnp.pad(x.astype(bf16), ((0, n_p - n), (0, cin_p - cin)))
    w_p = jnp.pad(w.astype(bf16), ((0, cin_p - cin), (0, cout_p - cout)))
    b_p = jnp.pad(b.astype(f32), (0, cout_p - cout)).reshape(1, cout_p)
    al_p = jnp.pad(prelu_alpha.astype(f32), (0, cout_p - cout)).reshape(1, cout_p)
    a_p = a_hat.astype(adjacency_dtype)
    if n_p != n:
        a_p = jnp.pad(a_p, ((0, n_p - n), (0, n_p - n)))

    vmem_limit = 32 * 1024 * 1024  # explicit scoped-VMEM budget, safe on v5e/v6e/v7x

    # ---- kernel 1: H = X @ W  (tiny; row-tiled so X never needs one VMEM blob) ----
    h = pl.pallas_call(
        _linear_kernel,
        out_shape=jax.ShapeDtypeStruct((n_p, cout_p), bf16),
        grid_spec=pltpu.PrefetchScalarGridSpec(
            num_scalar_prefetch=0,
            grid=(n_p // t_m,),
            in_specs=[
                pl.BlockSpec((t_m, cin_p), lambda i: (i, 0)),
                pl.BlockSpec((cin_p, cout_p), lambda i: (0, 0)),
            ],
            out_specs=pl.BlockSpec((t_m, cout_p), lambda i: (i, 0)),
        ),
        compiler_params=pltpu.CompilerParams(
            dimension_semantics=("parallel",),
            vmem_limit_bytes=vmem_limit,
        ),
        cost_estimate=pl.CostEstimate(
            flops=2 * n_p * cin_p * cout_p,
            transcendentals=0,
            bytes_accessed=n_p * cin_p * 2 + cin_p * cout_p * 2 + n_p * cout_p * 2,
        ),
    )(x_p, w_p)

    # ---- kernel 2: Y = normalize(prelu(Ahat @ H + b)) -----------------------------
    # A is streamed in (t_m, t_k) tiles; H / bias / alpha have constant block indices
    # so each is DMA'd exactly once and then stays VMEM-resident; the f32 output block
    # doubles as the accumulator (constant row index over k).
    out_p = pl.pallas_call(
        functools.partial(_gcn_agg_kernel, t_k),
        out_shape=jax.ShapeDtypeStruct((n_p, cout_p), f32),
        grid_spec=pltpu.PrefetchScalarGridSpec(
            num_scalar_prefetch=0,
            grid=(n_p // t_m, n_p // t_k),
            in_specs=[
                pl.BlockSpec((t_m, t_k), lambda i, k: (i, k)),        # Ahat tile
                pl.BlockSpec((n_p, cout_p), lambda i, k: (0, 0)),     # H (resident)
                pl.BlockSpec((1, cout_p), lambda i, k: (0, 0)),       # bias
                pl.BlockSpec((1, cout_p), lambda i, k: (0, 0)),       # PReLU alpha
            ],
            out_specs=pl.BlockSpec((t_m, cout_p), lambda i, k: (i, 0)),
        ),
        compiler_params=pltpu.CompilerParams(
            dimension_semantics=("parallel", "arbitrary"),
            vmem_limit_bytes=vmem_limit,
        ),
        cost_estimate=pl.CostEstimate(
            flops=2 * n_p * n_p * cout_p,
            transcendentals=n_p,
            bytes_accessed=n_p * n_p * a_bytes + n_p * cout_p * 2 + n_p * cout_p * 4,
        ),
    )(a_p, h, b_p, al_p)

    return out_p[:n, :cout]


def batch_gnn_forward(params, x, edge_index, edge_weight=None):
    """batch_gnn.forward with index=None (default): returns the encoder hidden."""
    a_hat = build_normalized_adjacency(edge_index, x.shape[0], edge_weight)
    hidden = gcn_encoder(x, a_hat, params["w"], params["b"], params["prelu_alpha"])
    return hidden


# --------------------- graph glue: normalized dense adjacency ----------------


def build_normalized_adjacency(edge_index, num_nodes, edge_weight=None):
    """Dense Ahat = D^{-1/2} (A + I) D^{-1/2}, matching PyG gcn_norm:
    existing self-loop weights are kept, nodes without one get weight 1.0.
    (Edge case: several duplicate self-loop edges on one node keep only one weight,
    same last-write-wins behavior as PyG's add_remaining_self_loops scatter.)"""
    src, dst = edge_index[0], edge_index[1]
    if edge_weight is None:
        edge_weight = jnp.ones((edge_index.shape[1],), jnp.float32)
    non_loop = src != dst
    w_off = jnp.where(non_loop, edge_weight, 0.0)
    a = jnp.zeros((num_nodes, num_nodes), jnp.float32).at[dst, src].add(w_off)
    # self-loop weights: existing self-loop weight if present, else fill value 1.0
    loop_w = jnp.ones((num_nodes,), jnp.float32)
    loop_idx = jnp.where(non_loop, num_nodes, src)          # OOB for non-loops -> dropped
    loop_w = loop_w.at[loop_idx].set(edge_weight, mode="drop")
    a = a + jnp.diag(loop_w)
    deg = jnp.sum(a, axis=1)
    safe = jnp.where(deg > 0.0, deg, 1.0)
    d_inv_sqrt = jnp.where(deg > 0.0, 1.0 / jnp.sqrt(safe), 0.0)
    return d_inv_sqrt[:, None] * a * d_inv_sqrt[None, :]


# ----------------------------- pure-JAX references ---------------------------


def batch_gnn_ref(x, a_hat, w, b, alpha, *, bf16_inputs=True):
    if bf16_inputs:  # same mixed-precision policy as the kernels
        h = jnp.dot(x.astype(jnp.bfloat16), w.astype(jnp.bfloat16),
                    preferred_element_type=jnp.float32).astype(jnp.bfloat16)
        y = jnp.dot(a_hat.astype(jnp.bfloat16), h,
                    preferred_element_type=jnp.float32)
    else:            # full-f32 module math
        y = a_hat @ (x @ w)
    y = y + b
    y = jnp.maximum(y, 0.0) + alpha * jnp.minimum(y, 0.0)
    norm = jnp.sqrt(jnp.sum(y * y, axis=1, keepdims=True))
    return y / jnp.maximum(norm, 1e-12)


# ----------------------------- demo / self-test -------------------------------


if __name__ == "__main__":
    N, IN_C, HID_C, E = 16, 4, 32, 48

    key = jax.random.PRNGKey(0)
    kx, ks, kd, kw, kb = jax.random.split(key, 5)

    x = jax.random.normal(kx, (N, IN_C), jnp.float32)
    edge_index = jnp.stack(
        [jax.random.randint(ks, (E,), 0, N), jax.random.randint(kd, (E,), 0, N)],
        axis=0,
    ).astype(jnp.int32)

    # GCNConv params (glorot weight; small bias to exercise the bias path),
    # PReLU per-channel weight = 0.25 (its reset state).
    limit = (6.0 / (IN_C + HID_C)) ** 0.5
    w = jax.random.uniform(kw, (IN_C, HID_C), jnp.float32, -limit, limit)
    b = 0.1 * jax.random.normal(kb, (HID_C,), jnp.float32)
    prelu_alpha = jnp.full((HID_C,), 0.25, jnp.float32)
    params = {"w": w, "b": b, "prelu_alpha": prelu_alpha}

    hidden = batch_gnn_forward(params, x, edge_index)
    hidden = jax.block_until_ready(hidden)
    assert hidden.shape == (N, HID_C)

    a_hat = build_normalized_adjacency(edge_index, N)
    ref_matched = batch_gnn_ref(x, a_hat, w, b, prelu_alpha, bf16_inputs=True)
    ref_f32 = batch_gnn_ref(x, a_hat, w, b, prelu_alpha, bf16_inputs=False)

    # tight check against the same mixed-precision math (kernel correctness)
    assert jnp.allclose(hidden, ref_matched, atol=1e-4, rtol=1e-4), float(
        jnp.max(jnp.abs(hidden - ref_matched))
    )
    # loose check against the full-f32 module math (bf16 streaming policy)
    assert jnp.allclose(hidden, ref_f32, atol=3e-2, rtol=3e-2), float(
        jnp.max(jnp.abs(hidden - ref_f32))
    )

    print("KERNEL_OK")
</pallas_src>

<mosaic_0001>
module attributes {stable_mosaic.version = 11 : i64} {
  func.func @_linear_kernel(%arg0: i32, %arg1: memref<128x128xbf16, #tpu.memory_space<vmem>>, %arg2: memref<128x128xbf16, #tpu.memory_space<vmem>>, %arg3: memref<128x128xbf16, #tpu.memory_space<vmem>>) attributes {dimension_semantics = [#tpu.dimension_semantics<parallel>], iteration_bounds = array<i64: 1>, scalar_prefetch = 0 : i64, scratch_operands = 0 : i64, tpu.core_type = #tpu.core_type<tc>, window_params = [{transform_indices = @transform_0, window_bounds = array<i64: 128, 128>}, {pipeline_mode = #tpu.pipeline_mode<synchronous>, transform_indices = @transform_1, window_bounds = array<i64: 128, 128>}, {transform_indices = @transform_2, window_bounds = array<i64: 128, 128>}]} {
    %c0 = arith.constant 0 : index
    %c0_0 = arith.constant 0 : index
    %0 = vector.load %arg1[%c0, %c0_0] : memref<128x128xbf16, #tpu.memory_space<vmem>>, vector<128x128xbf16>
    %c0_1 = arith.constant 0 : index
    %c0_2 = arith.constant 0 : index
    %1 = vector.load %arg2[%c0_1, %c0_2] : memref<128x128xbf16, #tpu.memory_space<vmem>>, vector<128x128xbf16>
    %cst = arith.constant dense<0.000000e+00> : vector<128x128xf32>
    %2 = tpu.matmul %0, %1, %cst {dimension_numbers = #tpu.dot_dimension_numbers<[1], [0], [0], [1], [0, 0, 1, 1], [], []>} : vector<128x128xbf16>, vector<128x128xbf16>, vector<128x128xf32> -> vector<128x128xf32>
    %3 = arith.truncf %2 : vector<128x128xf32> to vector<128x128xbf16>
    %c0_3 = arith.constant 0 : index
    %c0_4 = arith.constant 0 : index
    %4 = vector.load %arg3[%c0_3, %c0_4] : memref<128x128xbf16, #tpu.memory_space<vmem>>, vector<128x128xbf16>
    tpu.vector_store %arg3[%c0_3, %c0_4], %3 {strides = array<i32>} : memref<128x128xbf16, #tpu.memory_space<vmem>>, vector<128x128xbf16>,
    return
  }
  func.func @transform_0(%arg0: i32) -> (i32, i32) {
    %c0_i32 = arith.constant 0 : i32
    %c0_i32_0 = arith.constant 0 : i32
    return %arg0, %c0_i32 : i32, i32
  }
  func.func @transform_1(%arg0: i32) -> (i32, i32) {
    %c0_i32 = arith.constant 0 : i32
    %c0_i32_0 = arith.constant 0 : i32
    %c0_i32_1 = arith.constant 0 : i32
    return %c0_i32, %c0_i32_0 : i32, i32
  }
  func.func @transform_2(%arg0: i32) -> (i32, i32) {
    %c0_i32 = arith.constant 0 : i32
    %c0_i32_0 = arith.constant 0 : i32
    return %arg0, %c0_i32 : i32, i32
  }
}

</mosaic_0001>

<llo_original>
// kernel: tpu_custom_call.1
$region0: #{tpu_custom_call.1}
  #allocation0 [shape = 'u32[]', space=smem, size = 0x4, offset = 0x4, fixed_abs, tag = 'smem constant byte address 0x4 - core index']
  #allocation1 [shape = 'u32[144,128]{1,0:T(1,128)}', space=vmem, size = 0x12000, scoped, tag = 'internal scratch']
  %s0 = inlined_call_operand.hbm [shape: bf16[128,128], index: 0, kind: input, shape index: {}]
  %s1 = inlined_call_operand.hbm [shape: bf16[128,128], index: 1, kind: input, shape index: {}]
  %s2 = inlined_call_operand.hbm [shape: bf16[128,128], index: 2, kind: output, shape index: {}]
  %s3 = sld [smem:[#allocation0]]
  $region26: #{tpu_custom_call.1} parent=0
    _
  %s5 = ssub.s32 1, %s3
  %s6 = scalar_select 0, %s5, %s3
  $region1: #{tpu_custom_call.1} parent=0
    #allocation2 [shape = 'u8[32768]{0}', space=vmem, size = 0x8000, scoped, tag = 'input window, operand 0, single buffered']
    #allocation3 [shape = 's32[1]{0}', space=sflag, size = 0x4, scoped, tag = 'scoped memory for tpu_custom_call.1']
    #allocation4 [shape = 's32[1]{0}', space=sflag, size = 0x4, scoped, tag = 'scoped memory for tpu_custom_call.1']
    #allocation5 [shape = 'u8[32768]{0}', space=vmem, size = 0x8000, scoped, tag = 'input window, operand 1, single buffered']
    #allocation6 [shape = 's32[1]{0}', space=sflag, size = 0x4, scoped, tag = 'scoped memory for tpu_custom_call.1']
    #allocation7 [shape = 'u8[32768]{0}', space=vmem, size = 0x8000, scoped, tag = 'output window, operand 0, single buffered']
    %7 = vsyncpa [#allocation3], 0
    %8 = vsyncpa [#allocation6], 0
    %9 = vsyncpa [#allocation4], 0
    // Predicated region
    $region2: #{tpu_custom_call.1} parent=1 // pred_check
      _
    $region3: #{tpu_custom_call.1} parent=1 // pred_check_branch
      %11 = sbr.rel (0) target = $region5
    $region4: #{tpu_custom_call.1} parent=1 // pred_region
      %s13 = ssub.s32 1024, 1024
      %14 = vsyncadd [#allocation3], %s13
      %s15 = sshll.u32 [#allocation2], 4
      %s16 = int_to_ptr.vmem [resolvable:$true] %s15
      %21 = dma.hbm_to_vmem [thread:$0]  %s0, 1024, %s16, [#allocation3], 64, 64, 4
    $region5: #{tpu_custom_call.1} parent=1 // pred_fallthru
      _
    // Predicated region
    $region6: #{tpu_custom_call.1} parent=1 // pred_check
      _
    $region7: #{tpu_custom_call.1} parent=1 // pred_check_branch
      %23 = sbr.rel (0) target = $region9
    $region8: #{tpu_custom_call.1} parent=1 // pred_region
      %s25 = ssub.s32 1024, 1024
      %26 = vsyncadd [#allocation6], %s25
      %s27 = sshll.u32 [#allocation5], 4
      %s28 = int_to_ptr.vmem [resolvable:$true] %s27
      %33 = dma.hbm_to_vmem [thread:$0]  %s1, 1024, %s28, [#allocation6], 64, 64, 4
    $region9: #{tpu_custom_call.1} parent=1 // pred_fallthru
      _
    // Predicated region
    $region10: #{tpu_custom_call.1} parent=1 // pred_check
      _
    $region11: #{tpu_custom_call.1} parent=1 // pred_check_branch
      %35 = sbr.rel (0) target = $region13
    $region12: #{tpu_custom_call.1} parent=1 // pred_region
      %36 = dma.done [#allocation3], 1024
    $region13: #{tpu_custom_call.1} parent=1 // pred_fallthru
      _
    // Predicated region
    $region14: #{tpu_custom_call.1} parent=1 // pred_check
      _
    $region15: #{tpu_custom_call.1} parent=1 // pred_check_branch
      %38 = sbr.rel (0) target = $region17
    $region16: #{tpu_custom_call.1} parent=1 // pred_region
      %39 = dma.done [#allocation6], 1024
    $region17: #{tpu_custom_call.1} parent=1 // pred_fallthru
      _
    %v41 = vld [vmem:[#allocation2] sm:$0xf]
    %v42 = vld [vmem:[#allocation2 + $0x4] sm:$0xf]
    %v43 = vld [vmem:[#allocation2 + $0x8] sm:$0xf]
    %v44 = vld [vmem:[#allocation2 + $0xc] sm:$0xf]
    %v45 = vld [vmem:[#allocation2 + $0x10] sm:$0xf]
    %v46 = vld [vmem:[#allocation2 + $0x14] sm:$0xf]
    %v47 = vld [vmem:[#allocation2 + $0x18] sm:$0xf]
    %v48 = vld [vmem:[#allocation2 + $0x1c] sm:$0xf]
    %v49 = vld [vmem:[#allocation2 + $0x20] sm:$0xf]
    %v50 = vld [vmem:[#allocation2 + $0x24] sm:$0xf]
    %v51 = vld [vmem:[#allocation2 + $0x28] sm:$0xf]
    %v52 = vld [vmem:[#allocation2 + $0x2c] sm:$0xf]
    %v53 = vld [vmem:[#allocation2 + $0x30] sm:$0xf]
    %v54 = vld [vmem:[#allocation2 + $0x34] sm:$0xf]
    %v55 = vld [vmem:[#allocation2 + $0x38] sm:$0xf]
    %v56 = vld [vmem:[#allocation2 + $0x3c] sm:$0xf]
    %v57 = vld [vmem:[#allocation5] sm:$0xf]
    %v58 = vld [vmem:[#allocation5 + $0x4] sm:$0xf]
    %v59 = vld [vmem:[#allocation5 + $0x8] sm:$0xf]
    %v60 = vld [vmem:[#allocation5 + $0xc] sm:$0xf]
    %v61 = vld [vmem:[#allocation5 + $0x10] sm:$0xf]
    %v62 = vld [vmem:[#allocation5 + $0x14] sm:$0xf]
    %v63 = vld [vmem:[#allocation5 + $0x18] sm:$0xf]
    %v64 = vld [vmem:[#allocation5 + $0x1c] sm:$0xf]
    %v65 = vld [vmem:[#allocation5 + $0x20] sm:$0xf]
    %v66 = vld [vmem:[#allocation5 + $0x24] sm:$0xf]
    %v67 = vld [vmem:[#allocation5 + $0x28] sm:$0xf]
    %v68 = vld [vmem:[#allocation5 + $0x2c] sm:$0xf]
    %v69 = vld [vmem:[#allocation5 + $0x30] sm:$0xf]
    %v70 = vld [vmem:[#allocation5 + $0x34] sm:$0xf]
    %v71 = vld [vmem:[#allocation5 + $0x38] sm:$0xf]
    %v72 = vld [vmem:[#allocation5 + $0x3c] sm:$0xf]
    %v89 = vunpack.c.l.b16 %v41
    %v90 = vunpack.c.l.b16 %v42
    %v91 = vunpack.c.l.b16 %v43
    %v92 = vunpack.c.l.b16 %v44
    %v93 = vunpack.c.l.b16 %v45
    %v94 = vunpack.c.l.b16 %v46
    %v95 = vunpack.c.l.b16 %v47
    %v96 = vunpack.c.l.b16 %v48
    %v97 = vunpack.c.l.b16 %v49
    %v98 = vunpack.c.l.b16 %v50
    %v99 = vunpack.c.l.b16 %v51
    %v100 = vunpack.c.l.b16 %v52
    %v101 = vunpack.c.l.b16 %v53
    %v102 = vunpack.c.l.b16 %v54
    %v103 = vunpack.c.l.b16 %v55
    %v104 = vunpack.c.l.b16 %v56
    %v105 = vpack.c.b16 %v90, %v89
    %v106 = vpack.c.b16 %v92, %v91
    %v107 = vpack.c.b16 %v94, %v93
    %v108 = vpack.c.b16 %v96, %v95
    %v109 = vpack.c.b16 %v98, %v97
    %v110 = vpack.c.b16 %v100, %v99
    %v111 = vpack.c.b16 %v102, %v101
    %v112 = vpack.c.b16 %v104, %v103
    %v137 = vunpack.c.l.b16 %v57
    %v138 = vunpack.c.l.b16 %v58
    %v139 = vunpack.c.l.b16 %v59
    %v140 = vunpack.c.l.b16 %v60
    %v141 = vunpack.c.l.b16 %v61
    %v142 = vunpack.c.l.b16 %v62
    %v143 = vunpack.c.l.b16 %v63
    %v144 = vunpack.c.l.b16 %v64
    %v145 = vunpack.c.l.b16 %v65
    %v146 = vunpack.c.l.b16 %v66
    %v147 = vunpack.c.l.b16 %v67
    %v148 = vunpack.c.l.b16 %v68
    %v149 = vunpack.c.l.b16 %v69
    %v150 = vunpack.c.l.b16 %v70
    %v151 = vunpack.c.l.b16 %v71
    %v152 = vunpack.c.l.b16 %v72
    %v153 = vpack.c.b16 %v138, %v137
    %v154 = vpack.c.b16 %v140, %v139
    %v155 = vpack.c.b16 %v142, %v141
    %v156 = vpack.c.b16 %v144, %v143
    %v157 = vpack.c.b16 %v146, %v145
    %v158 = vpack.c.b16 %v148, %v147
    %v159 = vpack.c.b16 %v150, %v149
    %v160 = vpack.c.b16 %v152, %v151
    %169 = vmatprep.subr.bf16.mxu0 0
    %170 = vmatpush1.bf16.msra.mxu0 %v160
    %171 = vmatprep.subr.bf16.mxu0 0
    %172 = vmatpush1.bf16.msra.mxu0 %v159
    %173 = vmatprep.subr.bf16.mxu0 0
    %174 = vmatpush1.bf16.msra.mxu0 %v158
    %175 = vmatprep.subr.bf16.mxu0 0
    %176 = vmatpush1.bf16.msra.mxu0 %v157
    %177 = vmatprep.subr.bf16.mxu0 0
    %178 = vmatpush1.bf16.msra.mxu0 %v156
    %179 = vmatprep.subr.bf16.mxu0 0
    %180 = vmatpush1.bf16.msra.mxu0 %v155
    %181 = vmatprep.subr.bf16.mxu0 0
    %182 = vmatpush1.bf16.msra.mxu0 %v154
    %183 = vmatprep.subr.bf16.mxu0 0
    %184 = vmatpush1.bf16.msra.mxu0 %v153
    %185 = vmatprep.subr.bf16.mxu0 0
    %186 = vmatpush2.bf16.msra.mxu0 0
    %187 = vmatprep.subr.bf16.mxu0 0
    %188 = vmatpush2.bf16.msra.mxu0 0
    %189 = vmatprep.subr.bf16.mxu0 0
    %190 = vmatpush2.bf16.msra.mxu0 0
    %191 = vmatprep.subr.bf16.mxu0 0
    %192 = vmatpush2.bf16.msra.mxu0 0
    %193 = vmatprep.subr.bf16.mxu0 0
    %194 = vmatpush2.bf16.msra.mxu0 0
    %195 = vmatprep.subr.bf16.mxu0 0
    %196 = vmatpush2.bf16.msra.mxu0 0
    %197 = vmatprep.subr.bf16.mxu0 0
    %198 = vmatpush2.bf16.msra.mxu0 0
    %199 = vmatprep.subr.bf16.mxu0 0
    %200 = vmatpush2.bf16.msra.mxu0 0
    %201 = vmatprep.mubr.bf16.mxu0 0
    %202 = vmatmul.mubr.bf16.gmra.mxu0 %v105
    %v203 = vpop.f32.mrf.mxu0
    %v204 = vadd.f32 0.0, %v203
    %v205 = vpop.f32.mrf.mxu0
    %v206 = vpop.f32.mrf.mxu0
    %v207 = vadd.f32 0.0, %v206
    %v208 = vpop.f32.mrf.mxu0
    %209 = vmatprep.mubr.bf16.mxu0 0
    %210 = vmatmul.mubr.bf16.gmra.mxu0 %v106
    %v211 = vpop.f32.mrf.mxu0
    %v212 = vadd.f32 0.0, %v211
    %v213 = vpop.f32.mrf.mxu0
    %v214 = vpop.f32.mrf.mxu0
    %v215 = vadd.f32 0.0, %v214
    %v216 = vpop.f32.mrf.mxu0
    %217 = vmatprep.mubr.bf16.mxu0 0
    %218 = vmatmul.mubr.bf16.gmra.mxu0 %v107
    %v219 = vpop.f32.mrf.mxu0
    %v220 = vadd.f32 0.0, %v219
    %v221 = vpop.f32.mrf.mxu0
    %v222 = vpop.f32.mrf.mxu0
    %v223 = vadd.f32 0.0, %v222
    %v224 = vpop.f32.mrf.mxu0
    %225 = vmatprep.mubr.bf16.mxu0 0
    %226 = vmatmul.mubr.bf16.gmra.mxu0 %v108
    %v227 = vpop.f32.mrf.mxu0
    %v228 = vadd.f32 0.0, %v227
    %v229 = vpop.f32.mrf.mxu0
    %v230 = vpop.f32.mrf.mxu0
    %v231 = vadd.f32 0.0, %v230
    %v232 = vpop.f32.mrf.mxu0
    %233 = vmatprep.mubr.bf16.mxu0 0
    %234 = vmatmul.mubr.bf16.gmra.mxu0 %v109
    %v235 = vpop.f32.mrf.mxu0
    %v236 = vadd.f32 0.0, %v235
    %v237 = vpop.f32.mrf.mxu0
    %v238 = vpop.f32.mrf.mxu0
    %v239 = vadd.f32 0.0, %v238
    %v240 = vpop.f32.mrf.mxu0
    %241 = vmatprep.mubr.bf16.mxu0 0
    %242 = vmatmul.mubr.bf16.gmra.mxu0 %v110
    %v243 = vpop.f32.mrf.mxu0
    %v244 = vadd.f32 0.0, %v243
    %v245 = vpop.f32.mrf.mxu0
    %v246 = vpop.f32.mrf.mxu0
    %v247 = vadd.f32 0.0, %v246
    %v248 = vpop.f32.mrf.mxu0
    %249 = vmatprep.mubr.bf16.mxu0 0
    %250 = vmatmul.mubr.bf16.gmra.mxu0 %v111
    %v251 = vpop.f32.mrf.mxu0
    %v252 = vadd.f32 0.0, %v251
    %v253 = vpop.f32.mrf.mxu0
    %v254 = vpop.f32.mrf.mxu0
    %v255 = vadd.f32 0.0, %v254
    %v256 = vpop.f32.mrf.mxu0
    %257 = vmatprep.mubr.bf16.mxu0 0
    %258 = vmatmul.mubr.bf16.gmra.mxu0 %v112
    %v259 = vpop.f32.mrf.mxu0
    %v260 = vadd.f32 0.0, %v259
    %v261 = vpop.f32.mrf.mxu0
    %v262 = vpop.f32.mrf.mxu0
    %v263 = vadd.f32 0.0, %v262
    %v264 = vpop.f32.mrf.mxu0
    %265 = vdwg.mxu0
    %v266 = vpack.c.bf16 %v207, %v204
    %v267 = vpack.c.bf16 %v215, %v212
    %v268 = vpack.c.bf16 %v223, %v220
    %v269 = vpack.c.bf16 %v231, %v228
    %v270 = vpack.c.bf16 %v239, %v236
    %v271 = vpack.c.bf16 %v247, %v244
    %v272 = vpack.c.bf16 %v255, %v252
    %v273 = vpack.c.bf16 %v263, %v260
    %v282 = vunpack.c.l.b16 %v266
    %v283 = vunpack.c.h.b16 %v266
    %v284 = vunpack.c.l.b16 %v267
    %v285 = vunpack.c.h.b16 %v267
    %v286 = vunpack.c.l.b16 %v268
    %v287 = vunpack.c.h.b16 %v268
    %v288 = vunpack.c.l.b16 %v269
    %v289 = vunpack.c.h.b16 %v269
    %v290 = vunpack.c.l.b16 %v270
    %v291 = vunpack.c.h.b16 %v270
    %v292 = vunpack.c.l.b16 %v271
    %v293 = vunpack.c.h.b16 %v271
    %v294 = vunpack.c.l.b16 %v272
    %v295 = vunpack.c.h.b16 %v272
    %v296 = vunpack.c.l.b16 %v273
    %v297 = vunpack.c.h.b16 %v273
    %v298 = vpack.c.b16 %v282, %v282
    %v299 = vpack.c.b16 %v283, %v283
    %v300 = vpack.c.b16 %v284, %v284
    %v301 = vpack.c.b16 %v285, %v285
    %v302 = vpack.c.b16 %v286, %v286
    %v303 = vpack.c.b16 %v287, %v287
    %v304 = vpack.c.b16 %v288, %v288
    %v305 = vpack.c.b16 %v289, %v289
    %v306 = vpack.c.b16 %v290, %v290
    %v307 = vpack.c.b16 %v291, %v291
    %v308 = vpack.c.b16 %v292, %v292
    %v309 = vpack.c.b16 %v293, %v293
    %v310 = vpack.c.b16 %v294, %v294
    %v311 = vpack.c.b16 %v295, %v295
    %v312 = vpack.c.b16 %v296, %v296
    %v313 = vpack.c.b16 %v297, %v297
    %330 = vst [vmem:[#allocation7] sm:$0xf] %v298
    %331 = vst [vmem:[#allocation7 + $0x4] sm:$0xf] %v299
    %332 = vst [vmem:[#allocation7 + $0x8] sm:$0xf] %v300
    %333 = vst [vmem:[#allocation7 + $0xc] sm:$0xf] %v301
    %334 = vst [vmem:[#allocation7 + $0x10] sm:$0xf] %v302
    %335 = vst [vmem:[#allocation7 + $0x14] sm:$0xf] %v303
    %336 = vst [vmem:[#allocation7 + $0x18] sm:$0xf] %v304
    %337 = vst [vmem:[#allocation7 + $0x1c] sm:$0xf] %v305
    %338 = vst [vmem:[#allocation7 + $0x20] sm:$0xf] %v306
    %339 = vst [vmem:[#allocation7 + $0x24] sm:$0xf] %v307
    %340 = vst [vmem:[#allocation7 + $0x28] sm:$0xf] %v308
    %341 = vst [vmem:[#allocation7 + $0x2c] sm:$0xf] %v309
    %342 = vst [vmem:[#allocation7 + $0x30] sm:$0xf] %v310
    %343 = vst [vmem:[#allocation7 + $0x34] sm:$0xf] %v311
    %344 = vst [vmem:[#allocation7 + $0x38] sm:$0xf] %v312
    %345 = vst [vmem:[#allocation7 + $0x3c] sm:$0xf] %v313
    // Predicated region
    $region18: #{tpu_custom_call.1} parent=1 // pred_check
      _
    $region19: #{tpu_custom_call.1} parent=1 // pred_check_branch
      %347 = sbr.rel (0) target = $region21
    $region20: #{tpu_custom_call.1} parent=1 // pred_region
      %s349 = ssub.s32 1024, 1024
      %350 = vsyncadd [#allocation4], %s349
      %s351 = sshll.u32 [#allocation7], 4
      %s352 = int_to_ptr.vmem [resolvable:$true] %s351
      %357 = dma.vmem_to_hbm [thread:$0]  %s352, 1024, %s2, [#allocation4], 64, 64, 4
    $region21: #{tpu_custom_call.1} parent=1 // pred_fallthru
      _
    // Predicated region
    $region22: #{tpu_custom_call.1} parent=1 // pred_check
      _
    $region23: #{tpu_custom_call.1} parent=1 // pred_check_branch
      %359 = sbr.rel (0) target = $region25
    $region24: #{tpu_custom_call.1} parent=1 // pred_region
      %360 = dma.done [#allocation4], 1024
    $region25: #{tpu_custom_call.1} parent=1 // pred_fallthru
      _
    %361 = vsyncpa [#allocation3], 1
    %362 = vsyncpa [#allocation6], 1
    %363 = vsyncpa [#allocation4], 1

</llo_original>
